<compile_context>
chip_gen: v5e
topology: v5e:2x2
jax: 0.10.0
libtpu: 0.0.40
codegen_flags: <defaults>
</compile_context>

<pallas_src>
import jax
import jax.numpy as jnp
from jax.experimental import pallas as pl
from jax.experimental.pallas import tpu as pltpu

EPS = 1e-5


def _round_up(v, m):
    return ((v + m - 1) // m) * m


# ----------------------------------------------------------------------------
# Pallas kernel: fused Linear+BN+ReLU -> Linear+BN+ReLU
# ----------------------------------------------------------------------------
def _fc_fused_kernel(x_ref, w1_ref, b1_ref, w2_ref, b2_ref,
                     s1_ref, t1_ref, s2_ref, t2_ref, out_ref):
    """One grid step = one channel x one (TN, TH) position tile.

    x_ref  : (TN, 1, TH, bins) VMEM   natural NCHW block (contiguous DMA)
    w1_ref : (bn_unis, bins)   VMEM   first Linear weight
    b1_ref : (bn_unis, 1)      VMEM   first Linear bias
    w2_ref : (bins, bn_unis)   VMEM   second Linear weight
    b2_ref : (bins, 1)         VMEM   second Linear bias
    s?_ref, t?_ref : (C,)      SMEM   folded BatchNorm scale / bias per channel
    out_ref: (TN, 1, TH, bins) VMEM
    """
    c = pl.program_id(0)                       # channel of this grid step
    tn, _, th, bins = x_ref.shape
    p = tn * th                                # positions in this tile

    # Natural (positions, bins) tile -> lane-dense (bins, positions) on-chip.
    xT = x_ref[...].reshape(p, bins).T         # XLU transpose, lanes = positions

    y = jnp.dot(w1_ref[...], xT, preferred_element_type=jnp.float32)
    y = y + b1_ref[...]                        # (bn_unis, 1) broadcast over lanes
    y = y * s1_ref[c] + t1_ref[c]              # per-channel BN scalars from SMEM
    y = jnp.maximum(y, 0.0)

    z = jnp.dot(w2_ref[...], y, preferred_element_type=jnp.float32)
    z = z + b2_ref[...]
    z = z * s2_ref[c] + t2_ref[c]
    z = jnp.maximum(z, 0.0)

    # Back to the natural layout; store straight into the NCHW output block.
    out_ref[...] = z.T.reshape(tn, 1, th, bins)


# ----------------------------------------------------------------------------
# Tile selection (VMEM-budgeted, generation-safe)
# ----------------------------------------------------------------------------
_TILE_VMEM_BUDGET = 20 * 1024 * 1024     # double-buffered I/O tiles + temporaries


def _pick_pos_tile(n, h, bins, bn_unis):
    """Choose (TN, TH): batch rows / height rows per grid step.

    Positions per step P = TN*TH.  Budgeted per-position f32 VMEM cost:
      - in+out tiles, double buffered, lane-padded: 16 * round_up(bins, 128)
      - lane-dense temporaries (x^T, y, z):          4 * (3*bins + bn_unis)
    TH is a multiple-of-8 divisor of H so the in-kernel flatten of
    (TN, 1, TH, bins) -> (P, bins) is layout-trivial; otherwise fall back to
    the full H extent with TN = 1 (always a legal block).
    """
    per_pos = 16 * _round_up(bins, 128) + 4 * (3 * bins + bn_unis)
    p_max = min(16384, max(8, _TILE_VMEM_BUDGET // per_pos))

    th = 0
    for d in range(min(h, p_max), 7, -1):
        if h % d == 0 and d % 8 == 0:
            th = d
            break
    if th == 0:
        # TODO(synk): for very large H with no multiple-of-8 divisor, pad H in
        # the wrapper instead of taking the whole extent.
        return 1, h

    tn = 1
    for d in range(min(n, max(1, p_max // th)), 0, -1):
        if n % d == 0:
            tn = d
            break
    return tn, th


# ----------------------------------------------------------------------------
# Wrapper around pallas_call
# ----------------------------------------------------------------------------
def fc_forward(x_nchw, params):
    """FC forward.  x_nchw: (N, C, H, W) float32 with W == bins.  Returns NCHW."""
    w1, b1, s1c, t1c, w2, b2, s2c, t2c = params
    n, c, h, bins = x_nchw.shape
    bn_unis = w1.shape[0]

    tn, th = _pick_pos_tile(n, h, bins, bn_unis)
    grid = (c, n // tn, h // th)

    # Explicit VMEM limit: actual need (tiles + temporaries + weights) with
    # headroom, clamped to [32 MiB, 64 MiB] so it is legal on v5e/v6e/v7x.
    tile_bytes = 4 * tn * _round_up(th, 8) * _round_up(bins, 128) * 4
    temp_bytes = 4 * (3 * bins + bn_unis) * tn * th
    weight_bytes = 2 * 4 * (2 * _round_up(bn_unis, 8) * _round_up(bins, 128)
                            + _round_up(bn_unis, 8) * 128
                            + _round_up(bins, 8) * 128)
    needed = tile_bytes + temp_bytes + weight_bytes + (4 << 20)
    vmem_limit = int(min(64 << 20, max(32 << 20, needed)))

    pos_spec = pl.BlockSpec((tn, 1, th, bins),
                            lambda ci, ni, hi: (ni, ci, hi, 0))

    def whole(shape):
        return pl.BlockSpec(shape, lambda ci, ni, hi: (0,) * len(shape))

    smem = pl.BlockSpec(memory_space=pltpu.MemorySpace.SMEM)

    return pl.pallas_call(
        _fc_fused_kernel,
        out_shape=jax.ShapeDtypeStruct((n, c, h, bins), jnp.float32),
        grid=grid,
        in_specs=[
            pos_spec,                        # x (natural NCHW blocks)
            whole((bn_unis, bins)),          # w1
            whole((bn_unis, 1)),             # b1
            whole((bins, bn_unis)),          # w2
            whole((bins, 1)),                # b2
            smem, smem, smem, smem,          # BN1/BN2 per-channel scale & bias
        ],
        out_specs=pos_spec,
        compiler_params=pltpu.CompilerParams(
            dimension_semantics=("parallel", "parallel", "parallel"),
            vmem_limit_bytes=vmem_limit),
    )(x_nchw, w1, b1.reshape(bn_unis, 1), w2, b2.reshape(bins, 1),
      s1c, t1c, s2c, t2c)


# ----------------------------------------------------------------------------
# Deterministic parameter construction (matches FC(channel, bins).__init__)
# ----------------------------------------------------------------------------
def init_fc_params(key, channel, bins):
    bn_unis = max(bins // 4, 16)
    ks = jax.random.split(key, 12)
    # Linear(bins, bn_unis)
    w1 = jax.random.normal(ks[0], (bn_unis, bins), jnp.float32) * 0.1
    b1 = jax.random.normal(ks[1], (bn_unis,), jnp.float32) * 0.1
    # BatchNorm2d(channel) #1, eval-mode fold
    g1 = jax.random.uniform(ks[2], (channel,), jnp.float32, 0.5, 1.5)
    be1 = jax.random.normal(ks[3], (channel,), jnp.float32) * 0.1
    m1 = jax.random.normal(ks[4], (channel,), jnp.float32) * 0.1
    v1 = jax.random.uniform(ks[5], (channel,), jnp.float32, 0.5, 1.5)
    s1 = g1 / jnp.sqrt(v1 + EPS)
    t1 = be1 - m1 * s1
    # Linear(bn_unis, bins)
    w2 = jax.random.normal(ks[6], (bins, bn_unis), jnp.float32) * 0.1
    b2 = jax.random.normal(ks[7], (bins,), jnp.float32) * 0.1
    # BatchNorm2d(channel) #2, eval-mode fold
    g2 = jax.random.uniform(ks[8], (channel,), jnp.float32, 0.5, 1.5)
    be2 = jax.random.normal(ks[9], (channel,), jnp.float32) * 0.1
    m2 = jax.random.normal(ks[10], (channel,), jnp.float32) * 0.1
    v2 = jax.random.uniform(ks[11], (channel,), jnp.float32, 0.5, 1.5)
    s2 = g2 / jnp.sqrt(v2 + EPS)
    t2 = be2 - m2 * s2
    return (w1, b1, s1, t1, w2, b2, s2, t2)


def fc_reference(x, params):
    """Pure-JAX reference of the eval-mode FC module (NCHW), fp32-accurate."""
    w1, b1, s1, t1, w2, b2, s2, t2 = params
    c = x.shape[1]
    hi = jax.lax.Precision.HIGHEST
    y = jnp.einsum('nchw,fw->nchf', x, w1, precision=hi) + b1
    y = y * s1.reshape(1, c, 1, 1) + t1.reshape(1, c, 1, 1)
    y = jnp.maximum(y, 0.0)
    z = jnp.einsum('nchf,wf->nchw', y, w2, precision=hi) + b2
    z = z * s2.reshape(1, c, 1, 1) + t2.reshape(1, c, 1, 1)
    return jnp.maximum(z, 0.0)


if __name__ == "__main__":
    # x is NCHW like PyTorch; the trailing (width) axis must equal `bins`.
    N, C, H, BINS = 2, 4, 16, 16

    key = jax.random.PRNGKey(0)
    kx, kp = jax.random.split(key)
    x = jax.random.normal(kx, (N, C, H, BINS), jnp.float32)
    params = init_fc_params(kp, channel=C, bins=BINS)

    fwd = jax.jit(lambda inp: fc_forward(inp, params))
    out = fwd(x)
    jax.block_until_ready(out)

    assert out.shape == (N, C, H, BINS), out.shape
    assert bool(jnp.all(jnp.isfinite(out)))
    ref = fc_reference(x, params)
    err = float(jnp.max(jnp.abs(out - ref)))
    # Tolerance covers the TPU MXU's default f32 matmul precision.
    assert err < 5e-2, f"max abs error vs reference: {err}"
    print("KERNEL_OK")
</pallas_src>

<mosaic_0001>
module attributes {stable_mosaic.version = 11 : i64} {
  func.func @_fc_fused_kernel(%arg0: i32, %arg1: i32, %arg2: i32, %arg3: memref<2x1x16x16xf32, #tpu.memory_space<vmem>>, %arg4: memref<16x16xf32, #tpu.memory_space<vmem>>, %arg5: memref<16x1xf32, #tpu.memory_space<vmem>>, %arg6: memref<16x16xf32, #tpu.memory_space<vmem>>, %arg7: memref<16x1xf32, #tpu.memory_space<vmem>>, %arg8: memref<4xf32, #tpu.memory_space<smem>>, %arg9: memref<4xf32, #tpu.memory_space<smem>>, %arg10: memref<4xf32, #tpu.memory_space<smem>>, %arg11: memref<4xf32, #tpu.memory_space<smem>>, %arg12: memref<2x1x16x16xf32, #tpu.memory_space<vmem>>) attributes {dimension_semantics = [#tpu.dimension_semantics<parallel>, #tpu.dimension_semantics<parallel>, #tpu.dimension_semantics<parallel>], iteration_bounds = array<i64: 4, 1, 1>, scalar_prefetch = 0 : i64, scratch_operands = 0 : i64, tpu.core_type = #tpu.core_type<tc>, window_params = [{transform_indices = @transform_0, window_bounds = array<i64: 2, 1, 16, 16>}, {pipeline_mode = #tpu.pipeline_mode<synchronous>, transform_indices = @transform_1, window_bounds = array<i64: 16, 16>}, {pipeline_mode = #tpu.pipeline_mode<synchronous>, transform_indices = @transform_2, window_bounds = array<i64: 16, 1>}, {pipeline_mode = #tpu.pipeline_mode<synchronous>, transform_indices = @transform_3, window_bounds = array<i64: 16, 16>}, {pipeline_mode = #tpu.pipeline_mode<synchronous>, transform_indices = @transform_4, window_bounds = array<i64: 16, 1>}, {transform_indices = @transform_5, window_bounds = array<i64: 4>}, {transform_indices = @transform_6, window_bounds = array<i64: 4>}, {transform_indices = @transform_7, window_bounds = array<i64: 4>}, {transform_indices = @transform_8, window_bounds = array<i64: 4>}, {transform_indices = @transform_9, window_bounds = array<i64: 2, 1, 16, 16>}]} {
    %c0 = arith.constant 0 : index
    %c0_0 = arith.constant 0 : index
    %c0_1 = arith.constant 0 : index
    %c0_2 = arith.constant 0 : index
    %0 = vector.load %arg3[%c0, %c0_0, %c0_1, %c0_2] : memref<2x1x16x16xf32, #tpu.memory_space<vmem>>, vector<2x1x16x16xf32>
    %1 = vector.shape_cast %0 : vector<2x1x16x16xf32> to vector<32x16xf32>
    %2 = tpu.transpose %1, [1, 0] : vector<32x16xf32> -> vector<16x32xf32>
    %c0_3 = arith.constant 0 : index
    %c0_4 = arith.constant 0 : index
    %3 = vector.load %arg4[%c0_3, %c0_4] : memref<16x16xf32, #tpu.memory_space<vmem>>, vector<16x16xf32>
    %cst = arith.constant dense<0.000000e+00> : vector<16x32xf32>
    %4 = tpu.matmul %3, %2, %cst {dimension_numbers = #tpu.dot_dimension_numbers<[1], [0], [0], [1], [0, 0, 1, 1], [], []>} : vector<16x16xf32>, vector<16x32xf32>, vector<16x32xf32> -> vector<16x32xf32>
    %c0_5 = arith.constant 0 : index
    %c0_6 = arith.constant 0 : index
    %5 = vector.load %arg5[%c0_5, %c0_6] : memref<16x1xf32, #tpu.memory_space<vmem>>, vector<16x1xf32>
    %6 = vector.broadcast %5 : vector<16x1xf32> to vector<16x32xf32>
    %7 = arith.addf %4, %6 : vector<16x32xf32>
    %8 = arith.index_cast %arg0 : i32 to index
    %9 = memref.load %arg8[%8] : memref<4xf32, #tpu.memory_space<smem>>
    %10 = vector.broadcast %9 : f32 to vector<16x32xf32>
    %11 = arith.mulf %7, %10 : vector<16x32xf32>
    %12 = arith.index_cast %arg0 : i32 to index
    %13 = memref.load %arg9[%12] : memref<4xf32, #tpu.memory_space<smem>>
    %14 = vector.broadcast %13 : f32 to vector<16x32xf32>
    %15 = arith.addf %11, %14 : vector<16x32xf32>
    %cst_7 = arith.constant 0.000000e+00 : f32
    %16 = vector.broadcast %cst_7 : f32 to vector<16x32xf32>
    %17 = arith.maximumf %15, %16 : vector<16x32xf32>
    %c0_8 = arith.constant 0 : index
    %c0_9 = arith.constant 0 : index
    %18 = vector.load %arg6[%c0_8, %c0_9] : memref<16x16xf32, #tpu.memory_space<vmem>>, vector<16x16xf32>
    %cst_10 = arith.constant dense<0.000000e+00> : vector<16x32xf32>
    %19 = tpu.matmul %18, %17, %cst_10 {dimension_numbers = #tpu.dot_dimension_numbers<[1], [0], [0], [1], [0, 0, 1, 1], [], []>} : vector<16x16xf32>, vector<16x32xf32>, vector<16x32xf32> -> vector<16x32xf32>
    %c0_11 = arith.constant 0 : index
    %c0_12 = arith.constant 0 : index
    %20 = vector.load %arg7[%c0_11, %c0_12] : memref<16x1xf32, #tpu.memory_space<vmem>>, vector<16x1xf32>
    %21 = vector.broadcast %20 : vector<16x1xf32> to vector<16x32xf32>
    %22 = arith.addf %19, %21 : vector<16x32xf32>
    %23 = arith.index_cast %arg0 : i32 to index
    %24 = memref.load %arg10[%23] : memref<4xf32, #tpu.memory_space<smem>>
    %25 = vector.broadcast %24 : f32 to vector<16x32xf32>
    %26 = arith.mulf %22, %25 : vector<16x32xf32>
    %27 = arith.index_cast %arg0 : i32 to index
    %28 = memref.load %arg11[%27] : memref<4xf32, #tpu.memory_space<smem>>
    %29 = vector.broadcast %28 : f32 to vector<16x32xf32>
    %30 = arith.addf %26, %29 : vector<16x32xf32>
    %cst_13 = arith.constant 0.000000e+00 : f32
    %31 = vector.broadcast %cst_13 : f32 to vector<16x32xf32>
    %32 = arith.maximumf %30, %31 : vector<16x32xf32>
    %33 = tpu.transpose %32, [1, 0] : vector<16x32xf32> -> vector<32x16xf32>
    %34 = vector.shape_cast %33 : vector<32x16xf32> to vector<2x1x16x16xf32>
    %c0_14 = arith.constant 0 : index
    %c0_15 = arith.constant 0 : index
    %c0_16 = arith.constant 0 : index
    %c0_17 = arith.constant 0 : index
    %35 = vector.load %arg12[%c0_14, %c0_15, %c0_16, %c0_17] : memref<2x1x16x16xf32, #tpu.memory_space<vmem>>, vector<2x1x16x16xf32>
    tpu.vector_store %arg12[%c0_14, %c0_15, %c0_16, %c0_17], %34 {strides = array<i32>} : memref<2x1x16x16xf32, #tpu.memory_space<vmem>>, vector<2x1x16x16xf32>,
    return
  }
  func.func @transform_0(%arg0: i32, %arg1: i32, %arg2: i32) -> (i32, i32, i32, i32) {
    %c0_i32 = arith.constant 0 : i32
    %c0_i32_0 = arith.constant 0 : i32
    return %arg1, %arg0, %arg2, %c0_i32 : i32, i32, i32, i32
  }
  func.func @transform_1(%arg0: i32, %arg1: i32, %arg2: i32) -> (i32, i32) {
    %c0_i32 = arith.constant 0 : i32
    %c0_i32_0 = arith.constant 0 : i32
    %c0_i32_1 = arith.constant 0 : i32
    return %c0_i32, %c0_i32_0 : i32, i32
  }
  func.func @transform_2(%arg0: i32, %arg1: i32, %arg2: i32) -> (i32, i32) {
    %c0_i32 = arith.constant 0 : i32
    %c0_i32_0 = arith.constant 0 : i32
    %c0_i32_1 = arith.constant 0 : i32
    return %c0_i32, %c0_i32_0 : i32, i32
  }
  func.func @transform_3(%arg0: i32, %arg1: i32, %arg2: i32) -> (i32, i32) {
    %c0_i32 = arith.constant 0 : i32
    %c0_i32_0 = arith.constant 0 : i32
    %c0_i32_1 = arith.constant 0 : i32
    return %c0_i32, %c0_i32_0 : i32, i32
  }
  func.func @transform_4(%arg0: i32, %arg1: i32, %arg2: i32) -> (i32, i32) {
    %c0_i32 = arith.constant 0 : i32
    %c0_i32_0 = arith.constant 0 : i32
    %c0_i32_1 = arith.constant 0 : i32
    return %c0_i32, %c0_i32_0 : i32, i32
  }
  func.func @transform_5(%arg0: i32, %arg1: i32, %arg2: i32) -> i32 {
    %c0_i32 = arith.constant 0 : i32
    %c0_i32_0 = arith.constant 0 : i32
    return %c0_i32 : i32
  }
  func.func @transform_6(%arg0: i32, %arg1: i32, %arg2: i32) -> i32 {
    %c0_i32 = arith.constant 0 : i32
    %c0_i32_0 = arith.constant 0 : i32
    return %c0_i32 : i32
  }
  func.func @transform_7(%arg0: i32, %arg1: i32, %arg2: i32) -> i32 {
    %c0_i32 = arith.constant 0 : i32
    %c0_i32_0 = arith.constant 0 : i32
    return %c0_i32 : i32
  }
  func.func @transform_8(%arg0: i32, %arg1: i32, %arg2: i32) -> i32 {
    %c0_i32 = arith.constant 0 : i32
    %c0_i32_0 = arith.constant 0 : i32
    return %c0_i32 : i32
  }
  func.func @transform_9(%arg0: i32, %arg1: i32, %arg2: i32) -> (i32, i32, i32, i32) {
    %c0_i32 = arith.constant 0 : i32
    %c0_i32_0 = arith.constant 0 : i32
    return %arg1, %arg0, %arg2, %c0_i32 : i32, i32, i32, i32
  }
}

</mosaic_0001>

<llo_original>
// kernel: _lambda_.1
$region0: #{_lambda_.1}
  #allocation0 [shape = 'u32[]', space=smem, size = 0x4, offset = 0x4, fixed_abs, tag = 'smem constant byte address 0x4 - core index']
  #allocation1 [shape = 'u32[72,128]{1,0:T(1,128)}', space=vmem, size = 0x9000, scoped, tag = 'internal scratch']
  #allocation19 [shape = 's32[]', space=sflag, size = 0x4, offset = 0, fixed_abs, tag = 'sflag constant byte address 0x0 - dummy sync flag']
  #allocation21 [shape = 's32[]', space=sflag, size = 0x4, offset = 0, fixed_abs, tag = 'sflag constant byte address 0x0 - dummy sync flag']
  %s0 = inlined_call_operand.hbm [shape: f32[2,4,16,16], index: 0, kind: input, shape index: {}]
  %s1 = inlined_call_operand.hbm [shape: f32[16,16], index: 1, kind: input, shape index: {}]
  %s2 = inlined_call_operand.hbm [shape: f32[16,1], index: 2, kind: input, shape index: {}]
  %s3 = inlined_call_operand.hbm [shape: f32[16,16], index: 3, kind: input, shape index: {}]
  %s4 = inlined_call_operand.hbm [shape: f32[16,1], index: 4, kind: input, shape index: {}]
  %s5 = inlined_call_operand.hbm [shape: f32[4], index: 5, kind: input, shape index: {}]
  %s6 = inlined_call_operand.vmem [shape: f32[4], index: 6, kind: input, shape index: {}]
  %s7 = inlined_call_operand.vmem [shape: f32[4], index: 7, kind: input, shape index: {}]
  %s8 = inlined_call_operand.vmem [shape: f32[4], index: 8, kind: input, shape index: {}]
  %s9 = inlined_call_operand.hbm [shape: f32[2,4,16,16], index: 9, kind: output, shape index: {}]
  %s10 = sld [smem:[#allocation0]]
  $region105: #{_lambda_.1} parent=0
    _
  %s12 = ssub.s32 1, %s10
  %s13 = scalar_select 0, %s12, %s10
  $region1: #{_lambda_.1} parent=0
    #allocation2 [shape = 'u8[32768]{0}', space=vmem, size = 0x8000, scoped, tag = 'input window, operand 0']
    #allocation3 [shape = 's32[2]{0}', space=sflag, size = 0x8, scoped, tag = 'scoped memory for _lambda_.1']
    #allocation4 [shape = 's32[2]{0}', space=sflag, size = 0x8, scoped, tag = 'scoped memory for _lambda_.1']
    #allocation5 [shape = 's32[2]{0}', space=sflag, size = 0x8, scoped, tag = 'scoped memory for _lambda_.1']
    #allocation6 [shape = 's32[2]{0}', space=sflag, size = 0x8, scoped, tag = 'scoped memory for _lambda_.1']
    #allocation7 [shape = 'u8[8192]{0}', space=vmem, size = 0x2000, scoped, tag = 'input window, operand 1, single buffered']
    #allocation8 [shape = 's32[1]{0}', space=sflag, size = 0x4, scoped, tag = 'scoped memory for _lambda_.1']
    #allocation9 [shape = 'u8[8192]{0}', space=vmem, size = 0x2000, scoped, tag = 'input window, operand 2, single buffered']
    #allocation10 [shape = 'u8[8192]{0}', space=vmem, size = 0x2000, scoped, tag = 'input window, operand 3, single buffered']
    #allocation11 [shape = 's32[1]{0}', space=sflag, size = 0x4, scoped, tag = 'scoped memory for _lambda_.1']
    #allocation12 [shape = 'u8[8192]{0}', space=vmem, size = 0x2000, scoped, tag = 'input window, operand 4, single buffered']
    #allocation13 [shape = 'u8[512]{0}', space=smem, size = 0x200, scoped, tag = 'input window, operand 5, single buffered']
    #allocation14 [shape = 'u8[512]{0}', space=smem, size = 0x200, scoped, tag = 'input window, operand 6, single buffered']
    #allocation15 [shape = 'u8[512]{0}', space=smem, size = 0x200, scoped, tag = 'input window, operand 7, single buffered']
    #allocation16 [shape = 's32[1]{0}', space=sflag, size = 0x4, scoped, tag = 'scoped memory for _lambda_.1']
    #allocation17 [shape = 'u8[512]{0}', space=smem, size = 0x200, scoped, tag = 'input window, operand 8, single buffered']
    #allocation18 [shape = 'u8[32768]{0}', space=vmem, size = 0x8000, scoped, tag = 'output window, operand 0']
    %14 = vsyncpa [#allocation3], 0
    %s15 = scalar_lea.sflag [#allocation3], 1
    %16 = vsyncpa %s15, 0
    %17 = vsyncpa [#allocation8], 0
    %18 = vsyncpa [#allocation11], 0
    %19 = vsyncpa [#allocation5], 0
    %20 = vsyncpa [#allocation6], 0
    %21 = vsyncpa [#allocation16], 0
    %22 = vsyncpa [#allocation4], 0
    %s23 = scalar_lea.sflag [#allocation4], 1
    %24 = vsyncpa %s23, 0
    loop: start=0, step=1, limit=6
    $region2: #{_lambda_.1} parent=1 // loop_pre_header
      _
    $region3: #{_lambda_.1} parent=1 // loop_header
      %s26 = sphi 0, %s30
      %p27 = scmp.ge.s32.totalorder %s26, 6
      %s33 = sphi 0, %s52
      %s34 = sphi 0, %s48
      %s35 = sphi 0, %s44
      %s36 = sphi 0, %s33
      %s37 = sphi 0, %s34
      %s38 = sphi 0, %s35
      %s39 = sphi 0, %s36
      %s40 = sphi 0, %s37
      %s41 = sphi 0, %s38
      %s59 = sphi 0, %s61
      %s62 = sphi 0, %s59
      %s63 = sphi 0, %s62
      %s79 = sphi 0, %s63
      %s83 = sphi 0, %s83
      %s85 = sphi 0, %s83
      %s86 = sphi 0, %s85
      %s100 = sphi 0, %s86
      %s104 = sphi 0, %s104
      %s106 = sphi 0, %s104
      %s107 = sphi 0, %s106
      %s121 = sphi 0, %s107
      %s125 = sphi 0, %s125
      %s127 = sphi 0, %s125
      %s128 = sphi 0, %s127
      %s142 = sphi 0, %s128
      %s146 = sphi 0, %s146
      %s148 = sphi 0, %s146
      %s149 = sphi 0, %s148
      %s163 = sphi 0, %s149
      %s167 = sphi 0, %s167
      %s169 = sphi 0, %s167
      %s170 = sphi 0, %s169
      %s184 = sphi 0, %s170
      %s188 = sphi 0, %s188
      %s190 = sphi 0, %s188
      %s191 = sphi 0, %s190
      %s205 = sphi 0, %s191
      %s209 = sphi 0, %s209
      %s211 = sphi 0, %s209
      %s212 = sphi 0, %s211
      %s226 = sphi 0, %s212
      %s230 = sphi 0, %s230
      %s232 = sphi 0, %s230
      %s233 = sphi 0, %s232
      %s247 = sphi 0, %s233
      %s257 = sphi 0, %s259
      %s260 = sphi 0, %s257
      %s261 = sphi 0, %s260
      %s277 = sphi 0, %s261
    $region4: #{_lambda_.1} parent=1 // loop_header_branch
      %29 = sbr.rel (%p27) target = $region8
    $region5: #{_lambda_.1} parent=1 // loop_body
      %s31 = ssub.s32 %s26, 1
      %s32 = ssub.s32 %s26, 2
      %s42 = sadd.s32 1, %s35
      %p43 = scmp.ge.s32.totalorder %s42, 1
      %s44 = scalar_select %p43, 0, %s42
      %s45 = sadd.s32 1, %s34
      %s46 = scalar_select %p43, %s45, %s34
      %p47 = scmp.ge.s32.totalorder %s46, 1
      %s48 = scalar_select %p47, 0, %s46
      %s49 = sadd.s32 1, %s33
      %s50 = scalar_select %p47, %s49, %s33
      %p51 = scmp.ge.s32.totalorder %s50, 4
      %s52 = scalar_select %p51, 0, %s50
      %s53 = ssub.s32 %s34, %s48
      %s54 = ssub.s32 %s33, %s52
      %s55 = sor.u32 %s53, %s54
      %s56 = ssub.s32 %s35, %s44
      %s57 = sor.u32 %s55, %s56
      %p58 = scmp.eq.s32.totalorder %s57, 0
      %s60 = sadd.s32 %s59, 1
      %s61 = scalar_select %p58, %s59, %s60
      %p64 = pneg %p58
      %p65 = scmp.eq.s32.totalorder %s26, 3
      %p66 = por %p64, %p65
      %p67 = scmp.ne.s32.totalorder %s59, %s62
      %p68 = scmp.eq.s32.totalorder %s26, 0
      %p69 = por %p67, %p68
      %p70 = scmp.ne.s32.totalorder %s59, %s62
      %p71 = scmp.eq.s32.totalorder %s31, 3
      %p72 = por %p70, %p71
      %p73 = scmp.ne.s32.totalorder %s62, %s63
      %p74 = scmp.eq.s32.totalorder %s31, 0
      %p75 = por %p73, %p74
      %p76 = scmp.ne.s32.totalorder %s62, %s63
      %p77 = scmp.eq.s32.totalorder %s32, 3
      %p78 = por %p76, %p77
      %p80 = scmp.ne.s32.totalorder %s63, %s79
      %p81 = scmp.eq.s32.totalorder %s32, 0
      %p82 = por %p80, %p81
      %s84 = sadd.s32 %s83, 1
      %p87 = scmp.eq.s32.totalorder %s26, 3
      %p88 = scmp.ne.s32.totalorder %s83, %s85
      %p89 = scmp.eq.s32.totalorder %s26, 0
      %p90 = por %p88, %p89
      %p91 = scmp.ne.s32.totalorder %s83, %s85
      %p92 = scmp.eq.s32.totalorder %s31, 3
      %p93 = por %p91, %p92
      %p94 = scmp.ne.s32.totalorder %s85, %s86
      %p95 = scmp.eq.s32.totalorder %s31, 0
      %p96 = por %p94, %p95
      %p97 = scmp.ne.s32.totalorder %s85, %s86
      %p98 = scmp.eq.s32.totalorder %s32, 3
      %p99 = por %p97, %p98
      %p101 = scmp.ne.s32.totalorder %s86, %s100
      %p102 = scmp.eq.s32.totalorder %s32, 0
      %p103 = por %p101, %p102
      %s105 = sadd.s32 %s104, 1
      %p108 = scmp.eq.s32.totalorder %s26, 3
      %p109 = scmp.ne.s32.totalorder %s104, %s106
      %p110 = scmp.eq.s32.totalorder %s26, 0
      %p111 = por %p109, %p110
      %p112 = scmp.ne.s32.totalorder %s104, %s106
      %p113 = scmp.eq.s32.totalorder %s31, 3
      %p114 = por %p112, %p113
      %p115 = scmp.ne.s32.totalorder %s106, %s107
      %p116 = scmp.eq.s32.totalorder %s31, 0
      %p117 = por %p115, %p116
      %p118 = scmp.ne.s32.totalorder %s106, %s107
      %p119 = scmp.eq.s32.totalorder %s32, 3
      %p120 = por %p118, %p119
      %p122 = scmp.ne.s32.totalorder %s107, %s121
      %p123 = scmp.eq.s32.totalorder %s32, 0
      %p124 = por %p122, %p123
      %s126 = sadd.s32 %s125, 1
      %p129 = scmp.eq.s32.totalorder %s26, 3
      %p130 = scmp.ne.s32.totalorder %s125, %s127
      %p131 = scmp.eq.s32.totalorder %s26, 0
      %p132 = por %p130, %p131
      %p133 = scmp.ne.s32.totalorder %s125, %s127
      %p134 = scmp.eq.s32.totalorder %s31, 3
      %p135 = por %p133, %p134
      %p136 = scmp.ne.s32.totalorder %s127, %s128
      %p137 = scmp.eq.s32.totalorder %s31, 0
      %p138 = por %p136, %p137
      %p139 = scmp.ne.s32.totalorder %s127, %s128
      %p140 = scmp.eq.s32.totalorder %s32, 3
      %p141 = por %p139, %p140
      %p143 = scmp.ne.s32.totalorder %s128, %s142
      %p144 = scmp.eq.s32.totalorder %s32, 0
      %p145 = por %p143, %p144
      %s147 = sadd.s32 %s146, 1
      %p150 = scmp.eq.s32.totalorder %s26, 3
      %p151 = scmp.ne.s32.totalorder %s146, %s148
      %p152 = scmp.eq.s32.totalorder %s26, 0
      %p153 = por %p151, %p152
      %p154 = scmp.ne.s32.totalorder %s146, %s148
      %p155 = scmp.eq.s32.totalorder %s31, 3
      %p156 = por %p154, %p155
      %p157 = scmp.ne.s32.totalorder %s148, %s149
      %p158 = scmp.eq.s32.totalorder %s31, 0
      %p159 = por %p157, %p158
      %p160 = scmp.ne.s32.totalorder %s148, %s149
      %p161 = scmp.eq.s32.totalorder %s32, 3
      %p162 = por %p160, %p161
      %p164 = scmp.ne.s32.totalorder %s149, %s163
      %p165 = scmp.eq.s32.totalorder %s32, 0
      %p166 = por %p164, %p165
      %s168 = sadd.s32 %s167, 1
      %p171 = scmp.eq.s32.totalorder %s26, 3
      %p172 = scmp.ne.s32.totalorder %s167, %s169
      %p173 = scmp.eq.s32.totalorder %s26, 0
      %p174 = por %p172, %p173
      %p175 = scmp.ne.s32.totalorder %s167, %s169
      %p176 = scmp.eq.s32.totalorder %s31, 3
      %p177 = por %p175, %p176
      %p178 = scmp.ne.s32.totalorder %s169, %s170
      %p179 = scmp.eq.s32.totalorder %s31, 0
      %p180 = por %p178, %p179
      %p181 = scmp.ne.s32.totalorder %s169, %s170
      %p182 = scmp.eq.s32.totalorder %s32, 3
      %p183 = por %p181, %p182
      %p185 = scmp.ne.s32.totalorder %s170, %s184
      %p186 = scmp.eq.s32.totalorder %s32, 0
      %p187 = por %p185, %p186
      %s189 = sadd.s32 %s188, 1
      %p192 = scmp.eq.s32.totalorder %s26, 3
      %p193 = scmp.ne.s32.totalorder %s188, %s190
      %p194 = scmp.eq.s32.totalorder %s26, 0
      %p195 = por %p193, %p194
      %p196 = scmp.ne.s32.totalorder %s188, %s190
      %p197 = scmp.eq.s32.totalorder %s31, 3
      %p198 = por %p196, %p197
      %p199 = scmp.ne.s32.totalorder %s190, %s191
      %p200 = scmp.eq.s32.totalorder %s31, 0
      %p201 = por %p199, %p200
      %p202 = scmp.ne.s32.totalorder %s190, %s191
      %p203 = scmp.eq.s32.totalorder %s32, 3
      %p204 = por %p202, %p203
      %p206 = scmp.ne.s32.totalorder %s191, %s205
      %p207 = scmp.eq.s32.totalorder %s32, 0
      %p208 = por %p206, %p207
      %s210 = sadd.s32 %s209, 1
      %p213 = scmp.eq.s32.totalorder %s26, 3
      %p214 = scmp.ne.s32.totalorder %s209, %s211
      %p215 = scmp.eq.s32.totalorder %s26, 0
      %p216 = por %p214, %p215
      %p217 = scmp.ne.s32.totalorder %s209, %s211
      %p218 = scmp.eq.s32.totalorder %s31, 3
      %p219 = por %p217, %p218
      %p220 = scmp.ne.s32.totalorder %s211, %s212
      %p221 = scmp.eq.s32.totalorder %s31, 0
      %p222 = por %p220, %p221
      %p223 = scmp.ne.s32.totalorder %s211, %s212
      %p224 = scmp.eq.s32.totalorder %s32, 3
      %p225 = por %p223, %p224
      %p227 = scmp.ne.s32.totalorder %s212, %s226
      %p228 = scmp.eq.s32.totalorder %s32, 0
      %p229 = por %p227, %p228
      %s231 = sadd.s32 %s230, 1
      %p234 = scmp.eq.s32.totalorder %s26, 3
      %p235 = scmp.ne.s32.totalorder %s230, %s232
      %p236 = scmp.eq.s32.totalorder %s26, 0
      %p237 = por %p235, %p236
      %p238 = scmp.ne.s32.totalorder %s230, %s232
      %p239 = scmp.eq.s32.totalorder %s31, 3
      %p240 = por %p238, %p239
      %p241 = scmp.ne.s32.totalorder %s232, %s233
      %p242 = scmp.eq.s32.totalorder %s31, 0
      %p243 = por %p241, %p242
      %p244 = scmp.ne.s32.totalorder %s232, %s233
      %p245 = scmp.eq.s32.totalorder %s32, 3
      %p246 = por %p244, %p245
      %p248 = scmp.ne.s32.totalorder %s233, %s247
      %p249 = scmp.eq.s32.totalorder %s32, 0
      %p250 = por %p248, %p249
      %s251 = ssub.s32 %s34, %s48
      %s252 = ssub.s32 %s33, %s52
      %s253 = sor.u32 %s251, %s252
      %s254 = ssub.s32 %s35, %s44
      %s255 = sor.u32 %s253, %s254
      %p256 = scmp.eq.s32.totalorder %s255, 0
      %s258 = sadd.s32 %s257, 1
      %s259 = scalar_select %p256, %s257, %s258
      %p262 = pneg %p256
      %p263 = scmp.eq.s32.totalorder %s26, 3
      %p264 = por %p262, %p263
      %p265 = scmp.ne.s32.totalorder %s257, %s260
      %p266 = scmp.eq.s32.totalorder %s26, 0
      %p267 = por %p265, %p266
      %p268 = scmp.ne.s32.totalorder %s257, %s260
      %p269 = scmp.eq.s32.totalorder %s31, 3
      %p270 = por %p268, %p269
      %p271 = scmp.ne.s32.totalorder %s260, %s261
      %p272 = scmp.eq.s32.totalorder %s31, 0
      %p273 = por %p271, %p272
      %p274 = scmp.ne.s32.totalorder %s260, %s261
      %p275 = scmp.eq.s32.totalorder %s32, 3
      %p276 = por %p274, %p275
      %p278 = scmp.ne.s32.totalorder %s261, %s277
      %p279 = scmp.eq.s32.totalorder %s32, 0
      %p280 = por %p278, %p279
      %p281 = scmp.le.s32.totalorder 1, %s26
      %p282 = scmp.lt.s32.totalorder %s26, 5
      %p283 = pnand %p281, %p282
      %p284 = pneg %p283
      // Predicated region
      $region9: #{_lambda_.1} parent=5 // pred_check
        _
      $region10: #{_lambda_.1} parent=5 // pred_check_branch
        %286 = sbr.rel (%p283) target = $region12
      $region11: #{_lambda_.1} parent=5 // pred_region
        %s287 = ssub.s32 %s26, 1
        // Predicated region
        $region13: #{_lambda_.1} parent=11 // pred_check
          %p288 = pneg %p96
        $region14: #{_lambda_.1} parent=11 // pred_check_branch
          %290 = sbr.rel (%p288) target = $region16
        $region15: #{_lambda_.1} parent=11 // pred_region
          %292 = vsyncadd [#allocation8], 0
          %s293 = sshll.u32 %s1, 4
          %s294 = int_to_ptr.hbm [resolvable:$true] %s293
          %s295 = sshll.u32 [#allocation7], 4
          %s296 = int_to_ptr.vmem [resolvable:$true] %s295
          %301 = dma.hbm_to_vmem [thread:$0]  %s294, 256, %s296, [#allocation8], 128, 128, 8
        $region16: #{_lambda_.1} parent=11 // pred_fallthru
          _
        // Predicated region
        $region17: #{_lambda_.1} parent=11 // pred_check
          %p302 = pneg %p117
        $region18: #{_lambda_.1} parent=11 // pred_check_branch
          %304 = sbr.rel (%p302) target = $region20
        $region19: #{_lambda_.1} parent=11 // pred_region
          %306 = vsyncadd [#allocation8], 0
          %s307 = sshll.u32 %s2, 4
          %s308 = int_to_ptr.hbm [resolvable:$true] %s307
          %s309 = sshll.u32 [#allocation9], 4
          %s310 = int_to_ptr.vmem [resolvable:$true] %s309
          %315 = dma.hbm_to_vmem [thread:$0]  %s308, 256, %s310, [#allocation8], 128, 128, 8
        $region20: #{_lambda_.1} parent=11 // pred_fallthru
          _
        // Predicated region
        $region21: #{_lambda_.1} parent=11 // pred_check
          %p316 = pneg %p138
        $region22: #{_lambda_.1} parent=11 // pred_check_branch
          %318 = sbr.rel (%p316) target = $region24
        $region23: #{_lambda_.1} parent=11 // pred_region
          %320 = vsyncadd [#allocation11], 0
          %s321 = sshll.u32 %s3, 4
          %s322 = int_to_ptr.hbm [resolvable:$true] %s321
          %s323 = sshll.u32 [#allocation10], 4
          %s324 = int_to_ptr.vmem [resolvable:$true] %s323
          %329 = dma.hbm_to_vmem [thread:$0]  %s322, 256, %s324, [#allocation11], 128, 128, 8
        $region24: #{_lambda_.1} parent=11 // pred_fallthru
          _
        // Predicated region
        $region25: #{_lambda_.1} parent=11 // pred_check
          %p330 = pneg %p159
        $region26: #{_lambda_.1} parent=11 // pred_check_branch
          %332 = sbr.rel (%p330) target = $region28
        $region27: #{_lambda_.1} parent=11 // pred_region
          %334 = vsyncadd [#allocation11], 0
          %s335 = sshll.u32 %s4, 4
          %s336 = int_to_ptr.hbm [resolvable:$true] %s335
          %s337 = sshll.u32 [#allocation12], 4
          %s338 = int_to_ptr.vmem [resolvable:$true] %s337
          %343 = dma.hbm_to_vmem [thread:$0]  %s336, 256, %s338, [#allocation11], 128, 128, 8
        $region28: #{_lambda_.1} parent=11 // pred_fallthru
          _
        // Predicated region
        $region29: #{_lambda_.1} parent=11 // pred_check
          %p344 = pneg %p180
        $region30: #{_lambda_.1} parent=11 // pred_check_branch
          %346 = sbr.rel (%p344) target = $region32
        $region31: #{_lambda_.1} parent=11 // pred_region
          %348 = vsyncadd [#allocation5], 0
          %s350 = sshll.u32 %s5, 4
          %s351 = int_to_ptr.hbm [resolvable:$true] %s350
          %353 = dma.hbm_to_smem %s351, 16, [#allocation13], [#allocation5]
        $region32: #{_lambda_.1} parent=11 // pred_fallthru
          _
        // Predicated region
        $region33: #{_lambda_.1} parent=11 // pred_check
          %p354 = pneg %p201
        $region34: #{_lambda_.1} parent=11 // pred_check_branch
          %356 = sbr.rel (%p354) target = $region36
        $region35: #{_lambda_.1} parent=11 // pred_region
          %358 = vsyncadd [#allocation6], 0
          %s360 = sshll.u32 %s6, 4
          %s361 = int_to_ptr.vmem [resolvable:$true] %s360
          %363 = dma.vmem_to_smem %s361, 16, [#allocation14], [#allocation6]
        $region36: #{_lambda_.1} parent=11 // pred_fallthru
          _
        // Predicated region
        $region37: #{_lambda_.1} parent=11 // pred_check
          %p364 = pneg %p222
        $region38: #{_lambda_.1} parent=11 // pred_check_branch
          %366 = sbr.rel (%p364) target = $region40
        $region39: #{_lambda_.1} parent=11 // pred_region
          %368 = vsyncadd [#allocation16], 0
          %s370 = sshll.u32 %s7, 4
          %s371 = int_to_ptr.vmem [resolvable:$true] %s370
          %373 = dma.vmem_to_smem %s371, 16, [#allocation15], [#allocation16]
        $region40: #{_lambda_.1} parent=11 // pred_fallthru
          _
        // Predicated region
        $region41: #{_lambda_.1} parent=11 // pred_check
          %p374 = pneg %p243
        $region42: #{_lambda_.1} parent=11 // pred_check_branch
          %376 = sbr.rel (%p374) target = $region44
        $region43: #{_lambda_.1} parent=11 // pred_region
          %378 = vsyncadd [#allocation16], 0
          %s380 = sshll.u32 %s8, 4
          %s381 = int_to_ptr.vmem [resolvable:$true] %s380
          %383 = dma.vmem_to_smem %s381, 16, [#allocation17], [#allocation16]
        $region44: #{_lambda_.1} parent=11 // pred_fallthru
          _
      $region12: #{_lambda_.1} parent=5 // pred_fallthru
        _
      %p384 = scmp.lt.s32.totalorder %s26, 4
      // Predicated region
      $region45: #{_lambda_.1} parent=5 // pred_check
        %p385 = pneg %p384
      $region46: #{_lambda_.1} parent=5 // pred_check_branch
        %387 = sbr.rel (%p385) target = $region48
      $region47: #{_lambda_.1} parent=5 // pred_region
        // Predicated region
        $region49: #{_lambda_.1} parent=47 // pred_check
          %p388 = pneg %p69
        $region50: #{_lambda_.1} parent=47 // pred_check_branch
          %390 = sbr.rel (%p388) target = $region52
        $region51: #{_lambda_.1} parent=47 // pred_region
          #allocation20 [shape = 'u32[6]{0}', space=smem, size = 0x18, scoped, tag = 'DMA stride descriptor']
          %s391 = sand.u32 %s59, 1
          %s392 = scalar_lea.sflag [#allocation3], %s391
          %s393 = sand.u32 %s59, 1
          %s394 = smul.addr %s393, 32
          %s395 = scalar_lea.vmem [#allocation2], %s394
          %s396 = smul.u32 2, %s34
          %s397 = smul.u32 2, %s35
          %399 = vsyncadd %s392, 0
          %s400 = smul.addr %s33, 2
          %s401 = sadd.s32 %s397, %s400
          %s402 = smul.addr %s396, 8
          %s403 = sadd.s32 %s401, %s402
          %s404 = smul.addr %s403, 8
          %s405 = scalar_lea.hbm %s0, %s404
          %s407 = sshll.u32 1, 14
          %s408 = sxor.u32 4294967295, %s407
          %s410 = sld [smem:[#allocation0]]
          %s411 = sadd.s32 2, %s410
          %s413 = sshll.u32 7, 26
          %s414 = sxor.u32 4294967295, %s413
          %s415 = sand.u32 0, %s414
          %s416 = sshll.u32 %s411, 26
          %s417 = sor.u32 %s415, %s416
          %s418 = sshll.u32 %s405, 4
          %s419 = int_to_ptr.hbm [resolvable:$true] %s418
          %s420 = sshll.u32 %s395, 4
          %s421 = int_to_ptr.vmem [resolvable:$true] %s420
          %427 = sst [smem:[#allocation20]] 1024
          %s428 = scalar_lea.smem [#allocation20], 1
          %429 = sst [smem:[%s428]] 256
          %s430 = scalar_lea.smem [#allocation20], 2
          %431 = sst [smem:[%s430]] 2
          %s432 = scalar_lea.smem [#allocation20], 3
          %433 = sst [smem:[%s432]] 128
          %s434 = scalar_lea.smem [#allocation20], 4
          %435 = sst [smem:[%s434]] 128
          %s436 = scalar_lea.smem [#allocation20], 5
          %437 = sst [smem:[%s436]] 8
          %439 = dma.general %s419, 512, %s421, %s392, [#allocation19], [#allocation20], %s417, 0
        $region52: #{_lambda_.1} parent=47 // pred_fallthru
          _
      $region48: #{_lambda_.1} parent=5 // pred_fallthru
        _
      %p440 = scmp.le.s32.totalorder 1, %s26
      %p441 = scmp.lt.s32.totalorder %s26, 5
      %p442 = pnand %p440, %p441
      %p443 = pneg %p442
      // Predicated region
      $region53: #{_lambda_.1} parent=5 // pred_check
        _
      $region54: #{_lambda_.1} parent=5 // pred_check_branch
        %445 = sbr.rel (%p442) target = $region56
      $region55: #{_lambda_.1} parent=5 // pred_region
        %s446 = ssub.s32 %s26, 1
        %s447 = sand.u32 %s62, 1
        %s448 = scalar_lea.sflag [#allocation3], %s447
        %s449 = sand.u32 %s62, 1
        %s450 = smul.addr %s449, 32
        %s451 = scalar_lea.vmem [#allocation2], %s450
        // Predicated region
        $region57: #{_lambda_.1} parent=55 // pred_check
          %p452 = pneg %p75
        $region58: #{_lambda_.1} parent=55 // pred_check_branch
          %454 = sbr.rel (%p452) target = $region60
        $region59: #{_lambda_.1} parent=55 // pred_region
          %456 = dma.done %s448, 512
        $region60: #{_lambda_.1} parent=55 // pred_fallthru
          _
        // Predicated region
        $region61: #{_lambda_.1} parent=55 // pred_check
          %p457 = pneg %p96
        $region62: #{_lambda_.1} parent=55 // pred_check_branch
          %459 = sbr.rel (%p457) target = $region64
        $region63: #{_lambda_.1} parent=55 // pred_region
          %461 = dma.done [#allocation8], 256
        $region64: #{_lambda_.1} parent=55 // pred_fallthru
          _
        // Predicated region
        $region65: #{_lambda_.1} parent=55 // pred_check
          %p462 = pneg %p117
        $region66: #{_lambda_.1} parent=55 // pred_check_branch
          %464 = sbr.rel (%p462) target = $region68
        $region67: #{_lambda_.1} parent=55 // pred_region
          %466 = dma.done [#allocation8], 256
        $region68: #{_lambda_.1} parent=55 // pred_fallthru
          _
        // Predicated region
        $region69: #{_lambda_.1} parent=55 // pred_check
          %p467 = pneg %p138
        $region70: #{_lambda_.1} parent=55 // pred_check_branch
          %469 = sbr.rel (%p467) target = $region72
        $region71: #{_lambda_.1} parent=55 // pred_region
          %471 = dma.done [#allocation11], 256
        $region72: #{_lambda_.1} parent=55 // pred_fallthru
          _
        // Predicated region
        $region73: #{_lambda_.1} parent=55 // pred_check
          %p472 = pneg %p159
        $region74: #{_lambda_.1} parent=55 // pred_check_branch
          %474 = sbr.rel (%p472) target = $region76
        $region75: #{_lambda_.1} parent=55 // pred_region
          %476 = dma.done [#allocation11], 256
        $region76: #{_lambda_.1} parent=55 // pred_fallthru
          _
        // Predicated region
        $region77: #{_lambda_.1} parent=55 // pred_check
          %p477 = pneg %p180
        $region78: #{_lambda_.1} parent=55 // pred_check_branch
          %479 = sbr.rel (%p477) target = $region80
        $region79: #{_lambda_.1} parent=55 // pred_region
          %481 = dma.done [#allocation5], 16
        $region80: #{_lambda_.1} parent=55 // pred_fallthru
          _
        // Predicated region
        $region81: #{_lambda_.1} parent=55 // pred_check
          %p482 = pneg %p201
        $region82: #{_lambda_.1} parent=55 // pred_check_branch
          %484 = sbr.rel (%p482) target = $region84
        $region83: #{_lambda_.1} parent=55 // pred_region
          %486 = dma.done [#allocation6], 16
        $region84: #{_lambda_.1} parent=55 // pred_fallthru
          _
        // Predicated region
        $region85: #{_lambda_.1} parent=55 // pred_check
          %p487 = pneg %p222
        $region86: #{_lambda_.1} parent=55 // pred_check_branch
          %489 = sbr.rel (%p487) target = $region88
        $region87: #{_lambda_.1} parent=55 // pred_region
          %491 = dma.done [#allocation16], 16
        $region88: #{_lambda_.1} parent=55 // pred_fallthru
          _
        // Predicated region
        $region89: #{_lambda_.1} parent=55 // pred_check
          %p492 = pneg %p243
        $region90: #{_lambda_.1} parent=55 // pred_check_branch
          %494 = sbr.rel (%p492) target = $region92
        $region91: #{_lambda_.1} parent=55 // pred_region
          %496 = dma.done [#allocation16], 16
        $region92: #{_lambda_.1} parent=55 // pred_fallthru
          _
        %497 = sfence
        %s498 = sand.u32 %s62, 1
        %s499 = scalar_lea.sflag [#allocation3], %s498
        %s500 = sand.u32 %s62, 1
        %s501 = smul.addr %s500, 32
        %s502 = scalar_lea.vmem [#allocation2], %s501
        %p503 = pneg %p75
        %p504 = pneg %p72
        %p505 = pneg %p96
        %p506 = pneg %p93
        %p507 = pneg %p117
        %p508 = pneg %p114
        %p509 = pneg %p138
        %p510 = pneg %p135
        %p511 = pneg %p159
        %p512 = pneg %p156
        %p513 = pneg %p180
        %p514 = pneg %p177
        %p515 = pneg %p201
        %p516 = pneg %p198
        %p517 = pneg %p222
        %p518 = pneg %p219
        %p519 = pneg %p243
        %p520 = pneg %p240
        %p521 = pneg %p273
        %p522 = pneg %p270
        %s523 = sand.u32 %s260, 1
        %s524 = scalar_lea.sflag [#allocation4], %s523
        %s525 = sand.u32 %s260, 1
        %s526 = smul.addr %s525, 32
        %s527 = scalar_lea.vmem [#allocation18], %s526
        %s528 = smul.u32 2, %s37
        %s529 = smul.u32 2, %s38
        %s530 = smul.u32 2, %s37
        %s531 = smul.u32 2, %s38
        %v532 = vld [vmem:[%s451] sm:$0xff]
        %v533 = vld [vmem:[%s451 + $0x8] sm:$0xff]
        %v534 = vld [vmem:[%s451 + $0x10] sm:$0xff]
        %v535 = vld [vmem:[%s451 + $0x18] sm:$0xff]
        %v536 = vld [vmem:[#allocation7] sm:$0xff]
        %v537 = vld [vmem:[#allocation7 + $0x8] sm:$0xff]
        %v538 = vld [vmem:[#allocation9] sm:$0xff]
        %v539 = vld [vmem:[#allocation9 + $0x8] sm:$0xff]
        %541 = vset.pattern.permute.xlu0 0
        %542 = vperm.xlu0 %541, %v538
        %v543 = vpop.permute.xlu0 %542
        %546 = vset.pattern.permute.xlu0 0
        %547 = vperm.xlu0 %546, %v539
        %v548 = vpop.permute.xlu0 %547
        %vm550 = vcmask 130048
        %v552 = vsel %vm550, %v536, 0
        %v555 = vsel %vm550, %v537, 0
        %v558 = vsel %vm550, %v532, 0
        %v561 = vsel %vm550, %v533, 0
        %v564 = vsel %vm550, %v534, 0
        %v567 = vsel %vm550, %v535, 0
        %569 = vmatpush.xpose.msra.mxu0 0.0
        %570 = vmatpush.xpose.msra.mxu0 0.0
        %571 = vmatpush.xpose.msra.mxu0 0.0
        %572 = vmatpush.xpose.msra.mxu0 0.0
        %573 = vmatpush.xpose.msra.mxu0 0.0
        %574 = vmatpush.xpose.msra.mxu0 0.0
        %575 = vmatpush.xpose.msra.mxu0 0.0
        %576 = vmatpush.xpose.msra.mxu0 0.0
        %577 = vmatpush.xpose.msra.mxu0 0.0
        %578 = vmatpush.xpose.msra.mxu0 0.0
        %579 = vmatpush.xpose.msra.mxu0 0.0
        %580 = vmatpush.xpose.msra.mxu0 0.0
        %581 = vmatpush.xpose.msra.mxu0 %v567
        %582 = vmatpush.xpose.msra.mxu0 %v564
        %583 = vmatpush.xpose.msra.mxu0 %v561
        %584 = vmatpush.xpose.msra.mxu0 %v558
        %585 = vmatmul.f32.gmra.mxu0 %v552
        %v586 = vpop.f32.mrf.mxu0
        %v587 = vadd.f32 %v543, %v586
        %588 = vmatmul.f32.gmra.mxu0 %v555
        %v589 = vpop.f32.mrf.mxu0
        %v590 = vadd.f32 %v548, %v589
        %591 = vdwg.mxu0
        %s592 = sld [smem:[#allocation13 + %s36]]
        %v593 = vstv %s592
        %v594 = vmul.f32 %v587, %v593
        %v595 = vmul.f32 %v590, %v593
        %s596 = sld [smem:[#allocation14 + %s36]]
        %v597 = vstv %s596
        %v598 = vadd.f32 %v594, %v597
        %v599 = vadd.f32 %v595, %v597
        %v600 = vmax.f32 %v598, 0.0
        %v601 = vmax.f32 %v599, 0.0
        %v602 = vld [vmem:[#allocation10] sm:$0xff]
        %v603 = vld [vmem:[#allocation10 + $0x8] sm:$0xff]
        %v604 = vld [vmem:[#allocation12] sm:$0xff]
        %v605 = vld [vmem:[#allocation12 + $0x8] sm:$0xff]
        %607 = vset.pattern.permute.xlu0 0
        %608 = vperm.xlu0 %607, %v604
        %v609 = vpop.permute.xlu0 %608
        %612 = vset.pattern.permute.xlu0 0
        %613 = vperm.xlu0 %612, %v605
        %v614 = vpop.permute.xlu0 %613
        %v617 = vsel %vm550, %v602, 0
        %v620 = vsel %vm550, %v603, 0
        %622 = vmatpush.msra.mxu0 0.0
        %623 = vmatpush.msra.mxu0 0.0
        %624 = vmatpush.msra.mxu0 0.0
        %625 = vmatpush.msra.mxu0 0.0
        %626 = vmatpush.msra.mxu0 0.0
        %627 = vmatpush.msra.mxu0 0.0
        %628 = vmatpush.msra.mxu0 0.0
        %629 = vmatpush.msra.mxu0 0.0
        %630 = vmatpush.msra.mxu0 0.0
        %631 = vmatpush.msra.mxu0 0.0
        %632 = vmatpush.msra.mxu0 0.0
        %633 = vmatpush.msra.mxu0 0.0
        %634 = vmatpush.msra.mxu0 0.0
        %635 = vmatpush.msra.mxu0 0.0
        %636 = vmatpush.msra.mxu0 %v601
        %637 = vmatpush.msra.mxu0 %v600
        %638 = vmatmul.f32.gmra.mxu0 %v617
        %v639 = vpop.f32.mrf.mxu0
        %v640 = vadd.f32 %v609, %v639
        %641 = vmatmul.f32.gmra.mxu0 %v620
        %v642 = vpop.f32.mrf.mxu0
        %v643 = vadd.f32 %v614, %v642
        %644 = vdwg.mxu0
        %s645 = sld [smem:[#allocation15 + %s36]]
        %v646 = vstv %s645
        %v647 = vmul.f32 %v640, %v646
        %v648 = vmul.f32 %v643, %v646
        %s649 = sld [smem:[#allocation17 + %s36]]
        %v650 = vstv %s649
        %v651 = vadd.f32 %v647, %v650
        %v652 = vadd.f32 %v648, %v650
        %v653 = vmax.f32 %v651, 0.0
        %v654 = vmax.f32 %v652, 0.0
        %655 = vxpose.xlu0.b32.start [1/16] %v653, 128
        %656 = vxpose.xlu0.b32.cont [2/16] %v654, 128
        %657 = vxpose.xlu0.b32.cont [3/16] 0.0, 128
        %658 = vxpose.xlu0.b32.cont [4/16] 0.0, 128
        %659 = vxpose.xlu0.b32.cont [5/16] 0.0, 128
        %660 = vxpose.xlu0.b32.cont [6/16] 0.0, 128
        %661 = vxpose.xlu0.b32.cont [7/16] 0.0, 128
        %662 = vxpose.xlu0.b32.cont [8/16] 0.0, 128
        %663 = vxpose.xlu0.b32.cont [9/16] 0.0, 128
        %664 = vxpose.xlu0.b32.cont [10/16] 0.0, 128
        %665 = vxpose.xlu0.b32.cont [11/16] 0.0, 128
        %666 = vxpose.xlu0.b32.cont [12/16] 0.0, 128
        %667 = vxpose.xlu0.b32.cont [13/16] 0.0, 128
        %668 = vxpose.xlu0.b32.cont [14/16] 0.0, 128
        %669 = vxpose.xlu0.b32.cont [15/16] 0.0, 128
        %670 = vxpose.xlu0.b32.end [16/16] 0.0, 128
        %v671 = vpop.trf.xlu0
        %v672 = vpop.trf.xlu0
        %v673 = vpop.trf.xlu0
        %v674 = vpop.trf.xlu0
        %v675 = vpop.trf.xlu0
        %v676 = vpop.trf.xlu0
        %v677 = vpop.trf.xlu0
        %v678 = vpop.trf.xlu0
        %v679 = vpop.trf.xlu0
        %v680 = vpop.trf.xlu0
        %v681 = vpop.trf.xlu0
        %v682 = vpop.trf.xlu0
        %v683 = vpop.trf.xlu0
        %v684 = vpop.trf.xlu0
        %v685 = vpop.trf.xlu0
        %v686 = vpop.trf.xlu0
        %687 = vst.msk [vmem:[%s527] sm:$0xff] %vm550, %v671
        %688 = vst.msk [vmem:[%s527 + $0x8] sm:$0xff] %vm550, %v672
        %689 = vst.msk [vmem:[%s527 + $0x10] sm:$0xff] %vm550, %v673
        %690 = vst.msk [vmem:[%s527 + $0x18] sm:$0xff] %vm550, %v674
        %s691 = sand.u32 %s260, 1
        %s692 = scalar_lea.sflag [#allocation4], %s691
        %s693 = sand.u32 %s260, 1
        %s694 = smul.addr %s693, 32
        %s695 = scalar_lea.vmem [#allocation18], %s694
        // Predicated region
        $region93: #{_lambda_.1} parent=55 // pred_check
          %p696 = pneg %p270
        $region94: #{_lambda_.1} parent=55 // pred_check_branch
          %698 = sbr.rel (%p696) target = $region96
        $region95: #{_lambda_.1} parent=55 // pred_region
          #allocation22 [shape = 'u32[6]{0}', space=smem, size = 0x18, scoped, tag = 'DMA stride descriptor']
          %s699 = smul.u32 2, %s37
          %s700 = smul.u32 2, %s38
          %702 = vsyncadd %s692, 0
          %s703 = smul.addr %s36, 2
          %s704 = sadd.s32 %s700, %s703
          %s705 = smul.addr %s699, 8
          %s706 = sadd.s32 %s704, %s705
          %s707 = smul.addr %s706, 8
          %s708 = scalar_lea.hbm %s9, %s707
          %s710 = sshll.u32 1, 14
          %s711 = sxor.u32 4294967295, %s710
          %s714 = sshll.u32 7, 18
          %s715 = sxor.u32 4294967295, %s714
          %s716 = sand.u32 0, %s715
          %s718 = sor.u32 %s716, 0
          %s719 = sshll.u32 %s695, 4
          %s720 = int_to_ptr.vmem [resolvable:$true] %s719
          %s721 = sshll.u32 %s708, 4
          %s722 = int_to_ptr.hbm [resolvable:$true] %s721
          %728 = sst [smem:[#allocation22]] 256
          %s729 = scalar_lea.smem [#allocation22], 1
          %730 = sst [smem:[%s729]] 1024
          %s731 = scalar_lea.smem [#allocation22], 2
          %732 = sst [smem:[%s731]] 2
          %s733 = scalar_lea.smem [#allocation22], 3
          %734 = sst [smem:[%s733]] 128
          %s735 = scalar_lea.smem [#allocation22], 4
          %736 = sst [smem:[%s735]] 128
          %s737 = scalar_lea.smem [#allocation22], 5
          %738 = sst [smem:[%s737]] 8
          %740 = dma.general %s720, 512, %s722, %s692, [#allocation21], [#allocation22], %s718, 0
        $region96: #{_lambda_.1} parent=55 // pred_fallthru
          _
      $region56: #{_lambda_.1} parent=5 // pred_fallthru
        _
      %p741 = scmp.le.s32.totalorder 2, %s26
      // Predicated region
      $region97: #{_lambda_.1} parent=5 // pred_check
        %p742 = pneg %p741
      $region98: #{_lambda_.1} parent=5 // pred_check_branch
        %744 = sbr.rel (%p742) target = $region100
      $region99: #{_lambda_.1} parent=5 // pred_region
        %s745 = ssub.s32 %s26, 2
        // Predicated region
        $region101: #{_lambda_.1} parent=99 // pred_check
          %p746 = pneg %p276
        $region102: #{_lambda_.1} parent=99 // pred_check_branch
          %748 = sbr.rel (%p746) target = $region104
        $region103: #{_lambda_.1} parent=99 // pred_region
          %s749 = sand.u32 %s261, 1
          %s750 = scalar_lea.sflag [#allocation4], %s749
          %s751 = sand.u32 %s261, 1
          %s752 = smul.addr %s751, 32
          %s753 = scalar_lea.vmem [#allocation18], %s752
          %755 = dma.done %s750, 512
        $region104: #{_lambda_.1} parent=99 // pred_fallthru
          _
      $region100: #{_lambda_.1} parent=5 // pred_fallthru
        _
    $region6: #{_lambda_.1} parent=1 // loop_footer
      %s30 = sadd.s32 1, %s26
    $region7: #{_lambda_.1} parent=1 // loop_footer_branch
      %25 = sbr.rel target = $region3
    $region8: #{_lambda_.1} parent=1 // loop_exit
      _
    %756 = vsyncpa [#allocation3], 1
    %s757 = scalar_lea.sflag [#allocation3], 1
    %758 = vsyncpa %s757, 1
    %759 = vsyncpa [#allocation8], 1
    %760 = vsyncpa [#allocation11], 1
    %761 = vsyncpa [#allocation4], 1
    %s762 = scalar_lea.sflag [#allocation4], 1
    %763 = vsyncpa %s762, 1
    %764 = vsyncpa [#allocation5], 1
    %s765 = scalar_lea.sflag [#allocation5], 1
    %766 = vsyncpa %s765, 1
    %767 = vsyncpa [#allocation6], 1
    %s768 = scalar_lea.sflag [#allocation6], 1
    %769 = vsyncpa %s768, 1
    %770 = vsyncpa [#allocation16], 1

</llo_original>
